<compile_context>
chip_gen: v7x
topology: tpu7x:2x2x1
jax: 0.10.0
libtpu: 0.0.40
codegen_flags: <defaults>
</compile_context>

<pallas_src>
import jax
import jax.numpy as jnp
from jax.experimental import pallas as pl
from jax.experimental.pallas import tpu as pltpu


_LANES = 1024          # lane-dense width: multiple of 128
_MAX_TILE_ROWS = 2048  # 2048 x 1024 f32 tile = 8 MiB (multiple of 32 sublanes)


def _parametric_softplus_kernel(alpha_ref, beta_ref, x_ref, o_ref):
    a = alpha_ref[0, 0]
    b = beta_ref[0, 0]
    z = b * x_ref[...].astype(jnp.float32)
    # PyTorch F.softplus (beta=1, threshold=20): linear above threshold; the
    # min() inside exp keeps the unselected branch finite (incl. masked-edge
    # garbage elements, whose stores are discarded anyway).
    sp = jnp.where(z > 20.0, z, jnp.log1p(jnp.exp(jnp.minimum(z, 20.0))))
    o_ref[...] = (a * sp).astype(o_ref.dtype)


def parametric_softplus(x, alpha, beta):
    """x: any-shape array (e.g. NCHW). alpha, beta: scalar params (shape (1,))."""
    orig_shape = x.shape
    total = x.size
    itemsize = jnp.dtype(x.dtype).itemsize

    alpha_s = jnp.asarray(alpha, jnp.float32).reshape(1, 1)
    beta_s = jnp.asarray(beta, jnp.float32).reshape(1, 1)

    scalar_specs = [
        pl.BlockSpec(memory_space=pltpu.MemorySpace.SMEM),  # alpha scalar
        pl.BlockSpec(memory_space=pltpu.MemorySpace.SMEM),  # beta scalar
    ]

    if total % _LANES == 0:
        # Lane-dense 2-D view (free reshape of a contiguous array, no copy).
        rows = total // _LANES
        # Single full-height block for small tensors (block == array dim is
        # always legal); otherwise 2048-row tiles (multiple of every packed
        # sublane count) with a masked partial last block.
        tile_rows = rows if rows <= _MAX_TILE_ROWS else _MAX_TILE_ROWS
        x_in = x.reshape(rows, _LANES)
        grid = (pl.cdiv(rows, tile_rows),)
        block = (tile_rows, _LANES)
        data_spec = pl.BlockSpec(block, lambda i: (i, 0))
        out_spec = pl.BlockSpec(block, lambda i: (i, 0))
        tile_elems = tile_rows * _LANES
    else:
        # Flat 1-D view with masked edge block: no pad / slice HBM round-trips.
        max_block = _MAX_TILE_ROWS * _LANES
        block_elems = total if total <= max_block else max_block
        x_in = x.reshape(-1)
        grid = (pl.cdiv(total, block_elems),)
        data_spec = pl.BlockSpec((block_elems,), lambda i: (i,))
        out_spec = pl.BlockSpec((block_elems,), lambda i: (i,))
        tile_elems = block_elems

    # 2x double buffering of (in + out) tiles plus headroom, capped at 48 MiB
    # so we never claim all of v7x's 64 MiB physical VMEM.
    tile_bytes = tile_elems * itemsize
    vmem_limit = int(min(48 << 20, max(32 << 20, 6 * tile_bytes)))

    out = pl.pallas_call(
        _parametric_softplus_kernel,
        out_shape=jax.ShapeDtypeStruct(x_in.shape, x.dtype),
        grid=grid,
        in_specs=scalar_specs + [data_spec],
        out_specs=out_spec,
        compiler_params=pltpu.CompilerParams(
            dimension_semantics=("parallel",),
            vmem_limit_bytes=vmem_limit,
        ),
        cost_estimate=pl.CostEstimate(
            flops=5 * total,
            transcendentals=2 * total,
            bytes_accessed=2 * total * itemsize,
        ),
    )(alpha_s, beta_s, x_in)

    return out.reshape(orig_shape)


if __name__ == "__main__":
    key = jax.random.PRNGKey(0)
    k0, k1 = jax.random.split(key)

    # Matches nn.Parameter(torch.full((1,), init)) with size=None.
    alpha_init, beta_init = 0.2, 5.0
    alpha = jnp.full((1,), alpha_init, dtype=jnp.float32)
    beta = jnp.full((1,), beta_init, dtype=jnp.float32)

    def ref_fn(x):
        # Plain-JAX reference (same F.softplus semantics as PyTorch default).
        z = beta_init * x
        return alpha_init * jnp.where(
            z > 20.0, z, jnp.log1p(jnp.exp(jnp.minimum(z, 20.0)))
        )

    # Primary: NCHW activation (element count divisible by 1024 -> 2-D path).
    x = jax.random.normal(k0, (2, 4, 16, 16), dtype=jnp.float32)
    out = parametric_softplus(x, alpha, beta)
    jax.block_until_ready(out)
    assert out.shape == x.shape
    assert jnp.allclose(out, ref_fn(x), atol=1e-5, rtol=1e-5), "mismatch (2-D path)"

    # Secondary: odd element count -> flat 1-D path (no pad / slice copies).
    x2 = jax.random.normal(k1, (3, 5, 7), dtype=jnp.float32)
    out2 = parametric_softplus(x2, alpha, beta)
    jax.block_until_ready(out2)
    assert out2.shape == x2.shape
    assert jnp.allclose(out2, ref_fn(x2), atol=1e-5, rtol=1e-5), "mismatch (1-D path)"

    print("KERNEL_OK")
</pallas_src>

<mosaic_0001>
module attributes {stable_mosaic.version = 11 : i64} {
  func.func @_parametric_softplus_kernel(%arg0: i32, %arg1: memref<1x1xf32, #tpu.memory_space<smem>>, %arg2: memref<1x1xf32, #tpu.memory_space<smem>>, %arg3: memref<2x1024xf32, #tpu.memory_space<vmem>>, %arg4: memref<2x1024xf32, #tpu.memory_space<vmem>>) attributes {dimension_semantics = [#tpu.dimension_semantics<parallel>], iteration_bounds = array<i64: 1>, scalar_prefetch = 0 : i64, scratch_operands = 0 : i64, tpu.core_type = #tpu.core_type<tc>, window_params = [{transform_indices = @transform_0, window_bounds = array<i64: 1, 1>}, {transform_indices = @transform_1, window_bounds = array<i64: 1, 1>}, {transform_indices = @transform_2, window_bounds = array<i64: 2, 1024>}, {transform_indices = @transform_3, window_bounds = array<i64: 2, 1024>}]} {
    %c0 = arith.constant 0 : index
    %c0_0 = arith.constant 0 : index
    %0 = memref.load %arg1[%c0, %c0_0] : memref<1x1xf32, #tpu.memory_space<smem>>
    %c0_1 = arith.constant 0 : index
    %c0_2 = arith.constant 0 : index
    %1 = memref.load %arg2[%c0_1, %c0_2] : memref<1x1xf32, #tpu.memory_space<smem>>
    %c0_3 = arith.constant 0 : index
    %c0_4 = arith.constant 0 : index
    %2 = vector.load %arg3[%c0_3, %c0_4] : memref<2x1024xf32, #tpu.memory_space<vmem>>, vector<2x1024xf32>
    %3 = vector.broadcast %1 : f32 to vector<2x1024xf32>
    %4 = arith.mulf %3, %2 : vector<2x1024xf32>
    %cst = arith.constant 2.000000e+01 : f32
    %5 = vector.broadcast %cst : f32 to vector<2x1024xf32>
    %6 = arith.cmpf ogt, %4, %5 : vector<2x1024xf32>
    %cst_5 = arith.constant 2.000000e+01 : f32
    %7 = vector.broadcast %cst_5 : f32 to vector<2x1024xf32>
    %8 = arith.minimumf %4, %7 : vector<2x1024xf32>
    %9 = math.exp %8 : vector<2x1024xf32>
    %10 = math.log1p %9 : vector<2x1024xf32>
    %11 = arith.select %6, %4, %10 : vector<2x1024xi1>, vector<2x1024xf32>
    %12 = vector.broadcast %0 : f32 to vector<2x1024xf32>
    %13 = arith.mulf %12, %11 : vector<2x1024xf32>
    %c0_6 = arith.constant 0 : index
    %c0_7 = arith.constant 0 : index
    %14 = vector.load %arg4[%c0_6, %c0_7] : memref<2x1024xf32, #tpu.memory_space<vmem>>, vector<2x1024xf32>
    tpu.vector_store %arg4[%c0_6, %c0_7], %13 {strides = array<i32>} : memref<2x1024xf32, #tpu.memory_space<vmem>>, vector<2x1024xf32>,
    return
  }
  func.func @transform_0(%arg0: i32) -> (i32, i32) {
    %c0_i32 = arith.constant 0 : i32
    %c0_i32_0 = arith.constant 0 : i32
    %c0_i32_1 = arith.constant 0 : i32
    return %c0_i32, %c0_i32_0 : i32, i32
  }
  func.func @transform_1(%arg0: i32) -> (i32, i32) {
    %c0_i32 = arith.constant 0 : i32
    %c0_i32_0 = arith.constant 0 : i32
    %c0_i32_1 = arith.constant 0 : i32
    return %c0_i32, %c0_i32_0 : i32, i32
  }
  func.func @transform_2(%arg0: i32) -> (i32, i32) {
    %c0_i32 = arith.constant 0 : i32
    %c0_i32_0 = arith.constant 0 : i32
    return %arg0, %c0_i32 : i32, i32
  }
  func.func @transform_3(%arg0: i32) -> (i32, i32) {
    %c0_i32 = arith.constant 0 : i32
    %c0_i32_0 = arith.constant 0 : i32
    return %arg0, %c0_i32 : i32, i32
  }
}

</mosaic_0001>

<llo_original>
// kernel: tpu_custom_call.1
$region0: #{tpu_custom_call.1}
  #allocation0 [shape = 'u32[]', space=smem, size = 0x4, offset = 0x4, fixed_abs, tag = 'smem constant byte address 0x4 - core index']
  #allocation1 [shape = 'u32[144,128]{1,0:T(1,128)}', space=vmem, size = 0x12000, scoped, tag = 'internal scratch']
  #allocation2 [shape = 'f32[1,1]{1,0:T(1,128)S(6)}', space=smem, size = 0x200, scoped, tag = 'scoped memory for tpu_custom_call.1']
  #allocation3 [shape = 'f32[1,1]{1,0:T(1,128)S(6)}', space=smem, size = 0x200, scoped, tag = 'scoped memory for tpu_custom_call.1']
  %s0 = inlined_call_operand.<no memory space> [shape: f32[1,1], index: 0, kind: input, shape index: {}]
  %s1 = inlined_call_operand.<no memory space> [shape: f32[1,1], index: 1, kind: input, shape index: {}]
  %s2 = inlined_call_operand.hbm [shape: f32[2,1024], index: 2, kind: input, shape index: {}]
  %s3 = inlined_call_operand.hbm [shape: f32[2,1024], index: 3, kind: output, shape index: {}]
  %s4 = sld [smem:[#allocation0]]
  $region26: #{tpu_custom_call.1} parent=0
    _
  %s6 = ssub.s32 1, %s4
  %s7 = scalar_select 0, %s6, %s4
  %8 = sst [smem:[#allocation2]] %s0
  %9 = sst [smem:[#allocation3]] %s1
  $region1: #{tpu_custom_call.1} parent=0
    #allocation4 [shape = 'u8[8192]{0}', space=vmem, size = 0x2000, scoped, tag = 'input window, operand 2, single buffered']
    #allocation5 [shape = 's32[1]{0}', space=sflag, size = 0x4, scoped, tag = 'scoped memory for tpu_custom_call.1']
    #allocation6 [shape = 's32[1]{0}', space=sflag, size = 0x4, scoped, tag = 'scoped memory for tpu_custom_call.1']
    #allocation7 [shape = 'u8[8192]{0}', space=vmem, size = 0x2000, scoped, tag = 'output window, operand 0, single buffered']
    %10 = vsyncpa [#allocation5], 0
    %11 = vsyncpa [#allocation6], 0
    // Predicated region
    $region2: #{tpu_custom_call.1} parent=1 // pred_check
      _
    $region3: #{tpu_custom_call.1} parent=1 // pred_check_branch
      %13 = sbr.rel (0) target = $region5
    $region4: #{tpu_custom_call.1} parent=1 // pred_region
      _
    $region5: #{tpu_custom_call.1} parent=1 // pred_fallthru
      _
    // Predicated region
    $region6: #{tpu_custom_call.1} parent=1 // pred_check
      _
    $region7: #{tpu_custom_call.1} parent=1 // pred_check_branch
      %15 = sbr.rel (0) target = $region9
    $region8: #{tpu_custom_call.1} parent=1 // pred_region
      _
    $region9: #{tpu_custom_call.1} parent=1 // pred_fallthru
      _
    // Predicated region
    $region10: #{tpu_custom_call.1} parent=1 // pred_check
      _
    $region11: #{tpu_custom_call.1} parent=1 // pred_check_branch
      %17 = sbr.rel (0) target = $region13
    $region12: #{tpu_custom_call.1} parent=1 // pred_region
      %s19 = ssub.s32 256, 256
      %20 = vsyncadd [#allocation5], %s19
      %s22 = sshll.u32 [#allocation4], 4
      %s23 = int_to_ptr.vmem [resolvable:$true] %s22
      %25 = dma.hbm_to_vmem [thread:$0]  %s2, 256, %s23, [#allocation5]
    $region13: #{tpu_custom_call.1} parent=1 // pred_fallthru
      _
    // Predicated region
    $region14: #{tpu_custom_call.1} parent=1 // pred_check
      _
    $region15: #{tpu_custom_call.1} parent=1 // pred_check_branch
      %27 = sbr.rel (0) target = $region17
    $region16: #{tpu_custom_call.1} parent=1 // pred_region
      %28 = dma.done [#allocation5], 256
    $region17: #{tpu_custom_call.1} parent=1 // pred_fallthru
      _
    %s29 = sld [smem:[#allocation2]]
    %s30 = sld [smem:[#allocation3]]
    %v31 = vld [vmem:[#allocation4] sm:$0xff]
    %v32 = vld [vmem:[#allocation4 + $0x8] sm:$0xff]
    %v33 = vstv %s30
    %v34 = vmul.f32 %v33, %v31
    %v35 = vmul.f32 %v33, %v32
    %vm36 = vcmp.gt.f32.partialorder %v34, 20.0
    %vm37 = vcmp.gt.f32.partialorder %v35, 20.0
    %v38 = vmin.f32 %v34, 20.0
    %v39 = vmin.f32 %v35, 20.0
    %v40 = vmul.f32 %v38, 1.442695
    %v41 = vpow.pop %v40
    %v42 = vmul.f32 %v39, 1.442695
    %v43 = vpow.pop %v42
    %v44 = vadd.f32 %v41, 1.0
    %v45 = vlog2.pop %v44
    %v46 = vmul.f32 %v45, 0.6931472
    %v47 = vmul.f32 -0.5, %v41
    %v48 = vadd.f32 %v47, 1.0
    %v49 = vmul.f32 %v48, %v41
    %v50 = vand.u32 2147483647, %v41
    %vm51 = vcmp.lt.f32.partialorder %v50, 0.0004427343
    %v52 = vsel %vm51, %v49, %v46
    %v53 = vadd.f32 %v43, 1.0
    %v54 = vlog2.pop %v53
    %v55 = vmul.f32 %v54, 0.6931472
    %v56 = vmul.f32 -0.5, %v43
    %v57 = vadd.f32 %v56, 1.0
    %v58 = vmul.f32 %v57, %v43
    %v59 = vand.u32 2147483647, %v43
    %vm60 = vcmp.lt.f32.partialorder %v59, 0.0004427343
    %v61 = vsel %vm60, %v58, %v55
    %v62 = vsel %vm36, %v34, %v52
    %v63 = vsel %vm37, %v35, %v61
    %v64 = vstv %s29
    %v65 = vmul.f32 %v64, %v62
    %v66 = vmul.f32 %v64, %v63
    %67 = vst [vmem:[#allocation7] sm:$0xff] %v65
    %68 = vst [vmem:[#allocation7 + $0x8] sm:$0xff] %v66
    // Predicated region
    $region18: #{tpu_custom_call.1} parent=1 // pred_check
      _
    $region19: #{tpu_custom_call.1} parent=1 // pred_check_branch
      %70 = sbr.rel (0) target = $region21
    $region20: #{tpu_custom_call.1} parent=1 // pred_region
      %s72 = ssub.s32 256, 256
      %73 = vsyncadd [#allocation6], %s72
      %s75 = sshll.u32 [#allocation7], 4
      %s76 = int_to_ptr.vmem [resolvable:$true] %s75
      %78 = dma.vmem_to_hbm [thread:$0]  %s76, 256, %s3, [#allocation6]
    $region21: #{tpu_custom_call.1} parent=1 // pred_fallthru
      _
    // Predicated region
    $region22: #{tpu_custom_call.1} parent=1 // pred_check
      _
    $region23: #{tpu_custom_call.1} parent=1 // pred_check_branch
      %80 = sbr.rel (0) target = $region25
    $region24: #{tpu_custom_call.1} parent=1 // pred_region
      %81 = dma.done [#allocation6], 256
    $region25: #{tpu_custom_call.1} parent=1 // pred_fallthru
      _
    %82 = vsyncpa [#allocation5], 1
    %83 = vsyncpa [#allocation6], 1

</llo_original>
